<compile_context>
chip_gen: v5e
topology: v5e:2x2
jax: 0.10.0
libtpu: 0.0.40
codegen_flags: <defaults>
</compile_context>

<pallas_src>
import jax
import jax.numpy as jnp
from jax.experimental import pallas as pl
from jax.experimental.pallas import tpu as pltpu


def attention_kernel(x_ref, w1_ref, b1_ref, w2_ref, out_ref, wts_ref):
    """One grid step handles a (TB, S, D) slab of the batch.

    x_ref  : (TB, S, D) f32
    w1_ref : (D, H)     f32  (resident across grid steps)
    b1_ref : (1, H)     f32
    w2_ref : (1, H)     f32  (second Linear weight as a row; its bias is
                              dropped -- softmax over seq is shift-invariant)
    out_ref: (TB, D)    pooled output
    wts_ref: (TB, S)    softmax attention weights
    """
    tb, s_len, d = x_ref.shape
    hdim = w1_ref.shape[1]

    # ---- Linear(D->H) + ReLU: fold (TB, S) into the MXU M dimension. ----
    # S % 8 == 0 is asserted in the wrapper, so this reshape is a free
    # sublane relabeling (no tile-crossing copy).
    x2d = x_ref[...].reshape(tb * s_len, d)
    h = jnp.dot(x2d, w1_ref[...], preferred_element_type=jnp.float32)
    h = jnp.maximum(h + b1_ref[...], 0.0)                       # (TB*S, H)

    # ---- Linear(H->1): VPU multiply + lane reduce (no degenerate N=1 matmul).
    h3 = h.reshape(tb, s_len, hdim)                             # (TB, S, H)
    scores = jnp.sum(h3 * w2_ref[...], axis=-1)                 # (TB, S)

    # ---- softmax over the sequence axis (lane reductions; batch on sublanes).
    m = jnp.max(scores, axis=-1, keepdims=True)
    e = jnp.exp(scores - m)
    w = e / jnp.sum(e, axis=-1, keepdims=True)                  # (TB, S)
    wts_ref[...] = w

    # ---- pooled[b, :] = w[b, :] @ x[b, :, :] : batched (1,S)@(S,D) on the
    # otherwise-idle MXU.  Avoids the w[:, :, None] cross-lane broadcast
    # relayout and the full-tile elementwise temporary.
    pooled = jnp.einsum(
        "bqs,bsd->bqd",
        w.reshape(tb, 1, s_len),
        x_ref[...],
        preferred_element_type=jnp.float32,
    )                                                           # (TB, 1, D)
    out_ref[...] = pooled.reshape(tb, d)


def _vmem_capacity_bytes():
    """Physical VMEM per core; conservative fallback if the query fails."""
    try:
        return int(pltpu.get_tpu_info().vmem_capacity_bytes)
    except Exception:
        return 64 << 20          # v7x per-TensorCore figure (smallest current)


def _pick_batch_tile(B, S, D, vmem_cap):
    """Choose TB so the (TB, S, D) x block is a few MiB (per-generation
    budget) and, when possible, the grid has >= 2 steps (v7x megacore)."""
    bytes_per_row = S * D * 4
    # x-block target: ~vmem/16, clamped to [1 MiB, 8 MiB]
    #   v5e/v6e (128 MiB) -> 8 MiB,  v7x (64 MiB) -> 4 MiB.
    target = min(8 << 20, max(1 << 20, vmem_cap // 16))
    rows = max(1, target // bytes_per_row)

    def largest_tile_leq(limit):
        # Largest multiple of 8 that divides B and is <= limit (0 if none).
        t = (min(limit, B) // 8) * 8
        while t >= 8 and B % t:
            t -= 8
        return t

    if rows >= B:
        # Whole batch fits in one step; still prefer >= 2 grid steps so the
        # "parallel" grid axis can shard across both v7x TensorCores.
        if B >= 16:
            t = largest_tile_leq(B // 2)
            if t >= 8:
                return t
        return B
    t = largest_tile_leq(rows)
    return t if t >= 8 else B


def attention_layer(x, w1, b1, w2, b2=None, *, tb=None):
    """x: (B, S, D) f32 -> (pooled (B, D), attention weights (B, S)).

    b2 (the second Linear's bias) is accepted for API parity but unused:
    softmax over the sequence axis is invariant to that scalar shift.
    """
    B, S, D = x.shape
    H = w1.shape[1]
    assert S % 8 == 0, "S must be a multiple of 8 (sublane tile) for the matmul fold"

    vmem_cap = _vmem_capacity_bytes()
    if tb is None:
        tb = _pick_batch_tile(B, S, D, vmem_cap)
    assert B % tb == 0, "batch tile must divide B"

    b1_2d = b1.reshape(1, H)
    w2_row = w2.reshape(1, H)        # (H, 1) weight -> (1, H) row for the VPU path

    out_shapes = (
        jax.ShapeDtypeStruct((B, D), jnp.float32),
        jax.ShapeDtypeStruct((B, S), jnp.float32),
    )

    # Explicit VMEM budget: 2x x block (double-buffered input), ~2 tiles for
    # the (TB*S, H) intermediate + spills, double-buffered outputs, resident
    # weight tiles, plus 1 MiB headroom.
    x_blk = tb * S * D * 4
    h_blk = tb * S * H * 4
    out_blk = tb * (D + S) * 4
    est = 2 * x_blk + 2 * h_blk + 2 * out_blk + 4 * (D * H + 2 * H) * 4 + (1 << 20)
    vmem_limit = min(vmem_cap * 3 // 4, max(32 << 20, est))

    grid_spec = pltpu.PrefetchScalarGridSpec(
        num_scalar_prefetch=0,
        grid=(B // tb,),
        in_specs=[
            pl.BlockSpec((tb, S, D), lambda b: (b, 0, 0)),   # x: TB batch rows per step
            pl.BlockSpec((D, H), lambda b: (0, 0)),          # W1 (resident)
            pl.BlockSpec((1, H), lambda b: (0, 0)),          # b1
            pl.BlockSpec((1, H), lambda b: (0, 0)),          # W2 as a row
        ],
        out_specs=[
            pl.BlockSpec((tb, D), lambda b: (b, 0)),         # pooled slab
            pl.BlockSpec((tb, S), lambda b: (b, 0)),         # attention weights slab
        ],
    )

    return pl.pallas_call(
        attention_kernel,
        out_shape=out_shapes,
        grid_spec=grid_spec,
        compiler_params=pltpu.CompilerParams(
            dimension_semantics=("parallel",),
            vmem_limit_bytes=int(vmem_limit),
        ),
    )(x, w1, b1_2d, w2_row)


def reference(x, w1, b1, w2, b2):
    s = jnp.maximum(x @ w1 + b1, 0.0) @ w2 + b2          # (B, S, 1)
    w = jax.nn.softmax(s, axis=1)                        # (B, S, 1)
    return (x * w).sum(axis=1), w[..., 0]


if __name__ == "__main__":
    B, S, D, H = 2, 8, 32, 32

    key = jax.random.PRNGKey(0)
    kx, k1, k2, k3, k4 = jax.random.split(key, 5)

    x = jax.random.normal(kx, (B, S, D), dtype=jnp.float32)

    # Deterministic parameter init (PyTorch-Linear-style uniform bounds).
    bound1 = 1.0 / jnp.sqrt(D)
    w1 = jax.random.uniform(k1, (D, H), jnp.float32, -bound1, bound1)
    b1 = jax.random.uniform(k2, (H,), jnp.float32, -bound1, bound1)
    bound2 = 1.0 / jnp.sqrt(H)
    w2 = jax.random.uniform(k3, (H, 1), jnp.float32, -bound2, bound2)
    b2 = jax.random.uniform(k4, (1,), jnp.float32, -bound2, bound2)

    pooled, weights = attention_layer(x, w1, b1, w2, b2)
    jax.block_until_ready((pooled, weights))

    ref_pooled, ref_weights = reference(x, w1, b1, w2, b2)
    assert pooled.shape == (B, D) and weights.shape == (B, S)
    assert jnp.allclose(pooled, ref_pooled, atol=1e-5, rtol=1e-5)
    assert jnp.allclose(weights, ref_weights, atol=1e-5, rtol=1e-5)

    print("KERNEL_OK")
</pallas_src>

<mosaic_0001>
module attributes {stable_mosaic.version = 11 : i64} {
  func.func @attention_kernel(%arg0: i32, %arg1: memref<2x8x32xf32, #tpu.memory_space<vmem>>, %arg2: memref<32x32xf32, #tpu.memory_space<vmem>>, %arg3: memref<1x32xf32, #tpu.memory_space<vmem>>, %arg4: memref<1x32xf32, #tpu.memory_space<vmem>>, %arg5: memref<2x32xf32, #tpu.memory_space<vmem>>, %arg6: memref<2x8xf32, #tpu.memory_space<vmem>>) attributes {dimension_semantics = [#tpu.dimension_semantics<parallel>], iteration_bounds = array<i64: 1>, scalar_prefetch = 0 : i64, scratch_operands = 0 : i64, tpu.core_type = #tpu.core_type<tc>, window_params = [{transform_indices = @transform_0, window_bounds = array<i64: 2, 8, 32>}, {pipeline_mode = #tpu.pipeline_mode<synchronous>, transform_indices = @transform_1, window_bounds = array<i64: 32, 32>}, {pipeline_mode = #tpu.pipeline_mode<synchronous>, transform_indices = @transform_2, window_bounds = array<i64: 1, 32>}, {pipeline_mode = #tpu.pipeline_mode<synchronous>, transform_indices = @transform_3, window_bounds = array<i64: 1, 32>}, {transform_indices = @transform_4, window_bounds = array<i64: 2, 32>}, {transform_indices = @transform_5, window_bounds = array<i64: 2, 8>}]} {
    %c0 = arith.constant 0 : index
    %c0_0 = arith.constant 0 : index
    %c0_1 = arith.constant 0 : index
    %0 = vector.load %arg1[%c0, %c0_0, %c0_1] : memref<2x8x32xf32, #tpu.memory_space<vmem>>, vector<2x8x32xf32>
    %1 = vector.shape_cast %0 : vector<2x8x32xf32> to vector<16x32xf32>
    %c0_2 = arith.constant 0 : index
    %c0_3 = arith.constant 0 : index
    %2 = vector.load %arg2[%c0_2, %c0_3] : memref<32x32xf32, #tpu.memory_space<vmem>>, vector<32x32xf32>
    %cst = arith.constant dense<0.000000e+00> : vector<16x32xf32>
    %3 = tpu.matmul %1, %2, %cst {dimension_numbers = #tpu.dot_dimension_numbers<[1], [0], [0], [1], [0, 0, 1, 1], [], []>} : vector<16x32xf32>, vector<32x32xf32>, vector<16x32xf32> -> vector<16x32xf32>
    %c0_4 = arith.constant 0 : index
    %c0_5 = arith.constant 0 : index
    %4 = vector.load %arg3[%c0_4, %c0_5] : memref<1x32xf32, #tpu.memory_space<vmem>>, vector<1x32xf32>
    %5 = vector.broadcast %4 : vector<1x32xf32> to vector<16x32xf32>
    %6 = arith.addf %3, %5 : vector<16x32xf32>
    %cst_6 = arith.constant 0.000000e+00 : f32
    %7 = vector.broadcast %cst_6 : f32 to vector<16x32xf32>
    %8 = arith.maximumf %6, %7 : vector<16x32xf32>
    %9 = vector.shape_cast %8 : vector<16x32xf32> to vector<2x8x32xf32>
    %c0_7 = arith.constant 0 : index
    %c0_8 = arith.constant 0 : index
    %10 = vector.load %arg4[%c0_7, %c0_8] : memref<1x32xf32, #tpu.memory_space<vmem>>, vector<1x32xf32>
    %11 = vector.shape_cast %10 : vector<1x32xf32> to vector<1x1x32xf32>
    %12 = vector.broadcast %11 : vector<1x1x32xf32> to vector<2x8x32xf32>
    %13 = arith.mulf %9, %12 : vector<2x8x32xf32>
    %cst_9 = arith.constant dense<0.000000e+00> : vector<2x8xf32>
    %14 = vector.multi_reduction <add>, %13, %cst_9 [2] : vector<2x8x32xf32> to vector<2x8xf32>
    %cst_10 = arith.constant dense<0xFF800000> : vector<2xf32>
    %15 = vector.multi_reduction <maximumf>, %14, %cst_10 [1] : vector<2x8xf32> to vector<2xf32>
    %16 = vector.shape_cast %15 : vector<2xf32> to vector<2x1xf32>
    %17 = vector.broadcast %16 : vector<2x1xf32> to vector<2x8xf32>
    %18 = arith.subf %14, %17 : vector<2x8xf32>
    %19 = math.exp %18 : vector<2x8xf32>
    %cst_11 = arith.constant dense<0.000000e+00> : vector<2xf32>
    %20 = vector.multi_reduction <add>, %19, %cst_11 [1] : vector<2x8xf32> to vector<2xf32>
    %21 = vector.shape_cast %20 : vector<2xf32> to vector<2x1xf32>
    %22 = vector.broadcast %21 : vector<2x1xf32> to vector<2x8xf32>
    %23 = arith.divf %19, %22 : vector<2x8xf32>
    %c0_12 = arith.constant 0 : index
    %c0_13 = arith.constant 0 : index
    %24 = vector.load %arg6[%c0_12, %c0_13] : memref<2x8xf32, #tpu.memory_space<vmem>>, vector<2x8xf32>
    tpu.vector_store %arg6[%c0_12, %c0_13], %23 {strides = array<i32>} : memref<2x8xf32, #tpu.memory_space<vmem>>, vector<2x8xf32>,
    %25 = vector.shape_cast %23 : vector<2x8xf32> to vector<2x1x8xf32>
    %c0_14 = arith.constant 0 : index
    %c0_15 = arith.constant 0 : index
    %c0_16 = arith.constant 0 : index
    %26 = vector.load %arg1[%c0_14, %c0_15, %c0_16] : memref<2x8x32xf32, #tpu.memory_space<vmem>>, vector<2x8x32xf32>
    "tpu.trace_start"() <{level = 10 : i32, message = "bqs,bsd->bqd"}> : () -> ()
    %cst_17 = arith.constant dense<0.000000e+00> : vector<2x1x32xf32>
    %27 = tpu.matmul %25, %26, %cst_17 {dimension_numbers = #tpu.dot_dimension_numbers<[2], [1], [1], [2], [0, 0, 0, 1, 1, 2], [0], [0]>} : vector<2x1x8xf32>, vector<2x8x32xf32>, vector<2x1x32xf32> -> vector<2x1x32xf32>
    "tpu.trace_stop"() : () -> ()
    %28 = vector.shape_cast %27 : vector<2x1x32xf32> to vector<2x32xf32>
    %c0_18 = arith.constant 0 : index
    %c0_19 = arith.constant 0 : index
    %29 = vector.load %arg5[%c0_18, %c0_19] : memref<2x32xf32, #tpu.memory_space<vmem>>, vector<2x32xf32>
    tpu.vector_store %arg5[%c0_18, %c0_19], %28 {strides = array<i32>} : memref<2x32xf32, #tpu.memory_space<vmem>>, vector<2x32xf32>,
    return
  }
  func.func @transform_0(%arg0: i32) -> (i32, i32, i32) {
    %c0_i32 = arith.constant 0 : i32
    %c0_i32_0 = arith.constant 0 : i32
    %c0_i32_1 = arith.constant 0 : i32
    return %arg0, %c0_i32, %c0_i32_0 : i32, i32, i32
  }
  func.func @transform_1(%arg0: i32) -> (i32, i32) {
    %c0_i32 = arith.constant 0 : i32
    %c0_i32_0 = arith.constant 0 : i32
    %c0_i32_1 = arith.constant 0 : i32
    return %c0_i32, %c0_i32_0 : i32, i32
  }
  func.func @transform_2(%arg0: i32) -> (i32, i32) {
    %c0_i32 = arith.constant 0 : i32
    %c0_i32_0 = arith.constant 0 : i32
    %c0_i32_1 = arith.constant 0 : i32
    return %c0_i32, %c0_i32_0 : i32, i32
  }
  func.func @transform_3(%arg0: i32) -> (i32, i32) {
    %c0_i32 = arith.constant 0 : i32
    %c0_i32_0 = arith.constant 0 : i32
    %c0_i32_1 = arith.constant 0 : i32
    return %c0_i32, %c0_i32_0 : i32, i32
  }
  func.func @transform_4(%arg0: i32) -> (i32, i32) {
    %c0_i32 = arith.constant 0 : i32
    %c0_i32_0 = arith.constant 0 : i32
    return %arg0, %c0_i32 : i32, i32
  }
  func.func @transform_5(%arg0: i32) -> (i32, i32) {
    %c0_i32 = arith.constant 0 : i32
    %c0_i32_0 = arith.constant 0 : i32
    return %arg0, %c0_i32 : i32, i32
  }
}

</mosaic_0001>

<llo_original>
// kernel: tpu_custom_call.1
$region0: #{tpu_custom_call.1}
  #allocation0 [shape = 'u32[]', space=smem, size = 0x4, offset = 0x4, fixed_abs, tag = 'smem constant byte address 0x4 - core index']
  #allocation1 [shape = 'u32[72,128]{1,0:T(1,128)}', space=vmem, size = 0x9000, scoped, tag = 'internal scratch']
  %s0 = inlined_call_operand.hbm [shape: f32[2,8,32], index: 0, kind: input, shape index: {}]
  %s1 = inlined_call_operand.hbm [shape: f32[32,32], index: 1, kind: input, shape index: {}]
  %s2 = inlined_call_operand.vmem [shape: f32[1,32], index: 2, kind: input, shape index: {}]
  %s3 = inlined_call_operand.vmem [shape: f32[1,32], index: 3, kind: input, shape index: {}]
  %s4 = inlined_call_operand.hbm [shape: f32[2,32], index: 4, kind: output, shape index: {0}]
  %s5 = inlined_call_operand.hbm [shape: f32[2,8], index: 5, kind: output, shape index: {1}]
  %6 = xla_tuple %s4, %s5
  %s7 = sld [smem:[#allocation0]]
  $region42: #{tpu_custom_call.1} parent=0
    _
  %s9 = ssub.s32 1, %s7
  %s10 = scalar_select 0, %s9, %s7
  $region1: #{tpu_custom_call.1} parent=0
    #allocation2 [shape = 'u8[8192]{0}', space=vmem, size = 0x2000, scoped, tag = 'input window, operand 0, single buffered']
    #allocation3 [shape = 's32[1]{0}', space=sflag, size = 0x4, scoped, tag = 'scoped memory for tpu_custom_call.1']
    #allocation4 [shape = 's32[1]{0}', space=sflag, size = 0x4, scoped, tag = 'scoped memory for tpu_custom_call.1']
    #allocation5 [shape = 'u8[16384]{0}', space=vmem, size = 0x4000, scoped, tag = 'input window, operand 1, single buffered']
    #allocation6 [shape = 's32[1]{0}', space=sflag, size = 0x4, scoped, tag = 'scoped memory for tpu_custom_call.1']
    #allocation7 [shape = 'u8[1024]{0}', space=vmem, size = 0x400, scoped, tag = 'output window, operand 0, single buffered']
    #allocation8 [shape = 'u8[1024]{0}', space=vmem, size = 0x400, scoped, tag = 'output window, operand 1, single buffered']
    #allocation9 [shape = 's32[1]{0}', space=sflag, size = 0x4, scoped, tag = 'scoped memory for tpu_custom_call.1']
    %11 = vsyncpa [#allocation3], 0
    %12 = vsyncpa [#allocation6], 0
    %13 = vsyncpa [#allocation4], 0
    %14 = vsyncpa [#allocation9], 0
    // Predicated region
    $region2: #{tpu_custom_call.1} parent=1 // pred_check
      _
    $region3: #{tpu_custom_call.1} parent=1 // pred_check_branch
      %16 = sbr.rel (0) target = $region5
    $region4: #{tpu_custom_call.1} parent=1 // pred_region
      %18 = vsyncadd [#allocation3], 0
      %s19 = sshll.u32 %s0, 4
      %s20 = int_to_ptr.hbm [resolvable:$true] %s19
      %s21 = sshll.u32 [#allocation2], 4
      %s22 = int_to_ptr.vmem [resolvable:$true] %s21
      %27 = dma.hbm_to_vmem [thread:$0]  %s20, 256, %s22, [#allocation3], 128, 128, 8
    $region5: #{tpu_custom_call.1} parent=1 // pred_fallthru
      _
    // Predicated region
    $region6: #{tpu_custom_call.1} parent=1 // pred_check
      _
    $region7: #{tpu_custom_call.1} parent=1 // pred_check_branch
      %29 = sbr.rel (0) target = $region9
    $region8: #{tpu_custom_call.1} parent=1 // pred_region
      %31 = vsyncadd [#allocation6], 0
      %s32 = sshll.u32 %s1, 4
      %s33 = int_to_ptr.hbm [resolvable:$true] %s32
      %s34 = sshll.u32 [#allocation5], 4
      %s35 = int_to_ptr.vmem [resolvable:$true] %s34
      %40 = dma.hbm_to_vmem [thread:$0]  %s33, 512, %s35, [#allocation6], 128, 128, 8
    $region9: #{tpu_custom_call.1} parent=1 // pred_fallthru
      _
    // Predicated region
    $region10: #{tpu_custom_call.1} parent=1 // pred_check
      _
    $region11: #{tpu_custom_call.1} parent=1 // pred_check_branch
      %42 = sbr.rel (0) target = $region13
    $region12: #{tpu_custom_call.1} parent=1 // pred_region
      _
    $region13: #{tpu_custom_call.1} parent=1 // pred_fallthru
      _
    // Predicated region
    $region14: #{tpu_custom_call.1} parent=1 // pred_check
      _
    $region15: #{tpu_custom_call.1} parent=1 // pred_check_branch
      %44 = sbr.rel (0) target = $region17
    $region16: #{tpu_custom_call.1} parent=1 // pred_region
      _
    $region17: #{tpu_custom_call.1} parent=1 // pred_fallthru
      _
    // Predicated region
    $region18: #{tpu_custom_call.1} parent=1 // pred_check
      _
    $region19: #{tpu_custom_call.1} parent=1 // pred_check_branch
      %46 = sbr.rel (0) target = $region21
    $region20: #{tpu_custom_call.1} parent=1 // pred_region
      %48 = dma.done [#allocation3], 256
    $region21: #{tpu_custom_call.1} parent=1 // pred_fallthru
      _
    // Predicated region
    $region22: #{tpu_custom_call.1} parent=1 // pred_check
      _
    $region23: #{tpu_custom_call.1} parent=1 // pred_check_branch
      %50 = sbr.rel (0) target = $region25
    $region24: #{tpu_custom_call.1} parent=1 // pred_region
      %52 = dma.done [#allocation6], 512
    $region25: #{tpu_custom_call.1} parent=1 // pred_fallthru
      _
    %v53 = vld [vmem:[#allocation2] sm:$0xff]
    %v54 = vld [vmem:[#allocation2 + $0x8] sm:$0xff]
    %v55 = vld [vmem:[#allocation5] sm:$0xff]
    %v56 = vld [vmem:[#allocation5 + $0x8] sm:$0xff]
    %v57 = vld [vmem:[#allocation5 + $0x10] sm:$0xff]
    %v58 = vld [vmem:[#allocation5 + $0x18] sm:$0xff]
    %v59 = vld [vmem:[%s2] sm:$0x1]
    %v61 = vperm.slane %v59, 0
    %vm63 = vcmask 261120
    %v65 = vsel %vm63, %v53, 0
    %v68 = vsel %vm63, %v54, 0
    %70 = vmatpush.msra.mxu0 0.0
    %71 = vmatpush.msra.mxu0 0.0
    %72 = vmatpush.msra.mxu0 0.0
    %73 = vmatpush.msra.mxu0 0.0
    %74 = vmatpush.msra.mxu0 0.0
    %75 = vmatpush.msra.mxu0 0.0
    %76 = vmatpush.msra.mxu0 0.0
    %77 = vmatpush.msra.mxu0 0.0
    %78 = vmatpush.msra.mxu0 0.0
    %79 = vmatpush.msra.mxu0 0.0
    %80 = vmatpush.msra.mxu0 0.0
    %81 = vmatpush.msra.mxu0 0.0
    %82 = vmatpush.msra.mxu0 %v58
    %83 = vmatpush.msra.mxu0 %v57
    %84 = vmatpush.msra.mxu0 %v56
    %85 = vmatpush.msra.mxu0 %v55
    %86 = vmatmul.f32.gmra.mxu0 %v65
    %v87 = vpop.f32.mrf.mxu0
    %v88 = vadd.f32 %v61, %v87
    %89 = vmatmul.f32.gmra.mxu0 %v68
    %v90 = vpop.f32.mrf.mxu0
    %v91 = vadd.f32 %v61, %v90
    %92 = vdwg.mxu0
    %v93 = vmax.f32 %v88, 0.0
    %v94 = vmax.f32 %v91, 0.0
    %v95 = vld [vmem:[%s3] sm:$0x1]
    %v97 = vperm.slane %v95, 0
    %v99 = vmul.f32 %v93, %v97
    %v100 = vmul.f32 %v94, %v97
    %v101 = vsel %vm63, %v99, 0.0
    %102 = vadd.xlane.f32.xlu0 %v101
    %v103 = vpop.xlane.xlu0 %102
    %v104 = vsel %vm63, %v100, 0.0
    %105 = vadd.xlane.f32.xlu0 %v104
    %v106 = vpop.xlane.xlu0 %105
    %v109 = vlaneseq
    %v110 = vand.u32 %v109, 127
    %v111 = vperm.slane %v103, %v110
    %v112 = vperm.slane %v106, %v110
    %vm113 = vcmask 1041409
    %v114 = vsel %vm113, %v112, %v111
    %vm116 = vcmask 58368
    %v117 = vsel %vm116, %v114, -inf
    %118 = vmax.xlane.f32.xlu0 %v117
    %v119 = vpop.xlane.xlu0 %118
    %v121 = vperm.slane %v119, 0
    %v122 = vperm.slane %v119, 1
    %v125 = vsub.f32 %v103, %v121
    %v126 = vsub.f32 %v106, %v122
    %v127 = vmul.f32 %v125, 1.442695
    %v128 = vpow.pop %v127
    %v129 = vmul.f32 %v126, 1.442695
    %v130 = vpow.pop %v129
    %133 = vset.pattern.permute.xlu0 0
    %134 = vperm.xlu0 %133, %v128
    %v135 = vpop.permute.xlu0 %134
    %136 = vset.pattern.permute.xlu0 0
    %137 = vperm.xlu0 %136, %v130
    %v138 = vpop.permute.xlu0 %137
    %v139 = vperm.slane %v135, %v110
    %v140 = vperm.slane %v138, %v110
    %v141 = vsel %vm113, %v140, %v139
    %v143 = vsel %vm116, %v141, 0.0
    %144 = vadd.xlane.f32.xlu0 %v143
    %v145 = vpop.xlane.xlu0 %144
    %v147 = vperm.slane %v145, 0
    %v148 = vperm.slane %v145, 1
    %v151 = vrcp.pop %v147
    %v152 = vmul.f32 %v147, %v151
    %v153 = vsub.f32 1.0, %v152
    %v154 = vmul.f32 %v151, %v153
    %v155 = vadd.f32 %v151, %v154
    %vm156 = vweird.f32 %v147
    %vm157 = vweird.f32 %v151
    %vm158 = vmor %vm156, %vm157
    %v159 = vsel %vm158, %v151, %v155
    %v160 = vand.u32 2147483647, %v147
    %vm161 = vcmp.eq.f32.partialorder %v160, 8.507059e+37
    %v162 = vand.u32 %v147, 2147483648
    %v163 = vor.u32 1.1754944e-38, %v162
    %v164 = vsel %vm161, %v163, %v159
    %v165 = vmul.f32 %v128, %v164
    %v166 = vrcp.pop %v148
    %v167 = vmul.f32 %v148, %v166
    %v168 = vsub.f32 1.0, %v167
    %v169 = vmul.f32 %v166, %v168
    %v170 = vadd.f32 %v166, %v169
    %vm171 = vweird.f32 %v148
    %vm172 = vweird.f32 %v166
    %vm173 = vmor %vm171, %vm172
    %v174 = vsel %vm173, %v166, %v170
    %v175 = vand.u32 2147483647, %v148
    %vm176 = vcmp.eq.f32.partialorder %v175, 8.507059e+37
    %v177 = vand.u32 %v148, 2147483648
    %v178 = vor.u32 1.1754944e-38, %v177
    %v179 = vsel %vm176, %v178, %v174
    %v180 = vmul.f32 %v130, %v179
    %183 = vset.pattern.permute.xlu0 0
    %184 = vperm.xlu0 %183, %v165
    %v185 = vpop.permute.xlu0 %184
    %186 = vset.pattern.permute.xlu0 0
    %187 = vperm.xlu0 %186, %v180
    %v188 = vpop.permute.xlu0 %187
    %v189 = vperm.slane %v185, %v110
    %v190 = vperm.slane %v188, %v110
    %v191 = vsel %vm113, %v190, %v189
    %193 = vst.msk [vmem:[#allocation8] sm:$0x3] %vm116, %v191
    %v194 = vld [vmem:[#allocation2] sm:$0xff]
    %v195 = vld [vmem:[#allocation2 + $0x8] sm:$0xff]
    %vm196 = vcmask 64512
    %v197 = vsel %vm196, %v189, 0
    %199 = vmatpush.msra.mxu0 0.0
    %200 = vmatpush.msra.mxu0 0.0
    %201 = vmatpush.msra.mxu0 0.0
    %202 = vmatpush.msra.mxu0 0.0
    %203 = vmatpush.msra.mxu0 0.0
    %204 = vmatpush.msra.mxu0 0.0
    %205 = vmatpush.msra.mxu0 0.0
    %206 = vmatpush.msra.mxu0 0.0
    %207 = vmatpush.msra.mxu0 0.0
    %208 = vmatpush.msra.mxu0 0.0
    %209 = vmatpush.msra.mxu0 0.0
    %210 = vmatpush.msra.mxu0 0.0
    %211 = vmatpush.msra.mxu0 0.0
    %212 = vmatpush.msra.mxu0 0.0
    %213 = vmatpush.msra.mxu0 0.0
    %214 = vmatpush.msra.mxu0 %v194
    %215 = vmatmul.f32.gmra.mxu0 %v197
    %v216 = vpop.f32.mrf.mxu0
    %v217 = vadd.f32 0.0, %v216
    %218 = vdwg.mxu0
    %v219 = vsel %vm196, %v190, 0
    %221 = vmatpush.msra.mxu0 0.0
    %222 = vmatpush.msra.mxu0 0.0
    %223 = vmatpush.msra.mxu0 0.0
    %224 = vmatpush.msra.mxu0 0.0
    %225 = vmatpush.msra.mxu0 0.0
    %226 = vmatpush.msra.mxu0 0.0
    %227 = vmatpush.msra.mxu0 0.0
    %228 = vmatpush.msra.mxu0 0.0
    %229 = vmatpush.msra.mxu0 0.0
    %230 = vmatpush.msra.mxu0 0.0
    %231 = vmatpush.msra.mxu0 0.0
    %232 = vmatpush.msra.mxu0 0.0
    %233 = vmatpush.msra.mxu0 0.0
    %234 = vmatpush.msra.mxu0 0.0
    %235 = vmatpush.msra.mxu0 0.0
    %236 = vmatpush.msra.mxu0 %v195
    %237 = vmatmul.f32.gmra.mxu0 %v219
    %v238 = vpop.f32.mrf.mxu0
    %v239 = vadd.f32 0.0, %v238
    %240 = vdwg.mxu0
    %v243 = vrot.slane %v239, 7
    %v244 = vsel %vm113, %v243, %v217
    %vm246 = vcmask 254976
    %247 = vst.msk [vmem:[#allocation7] sm:$0x3] %vm246, %v244
    // Predicated region
    $region26: #{tpu_custom_call.1} parent=1 // pred_check
      _
    $region27: #{tpu_custom_call.1} parent=1 // pred_check_branch
      %249 = sbr.rel (0) target = $region29
    $region28: #{tpu_custom_call.1} parent=1 // pred_region
      %251 = vsyncadd [#allocation4], 0
      %s253 = sshll.u32 [#allocation7], 4
      %s254 = int_to_ptr.vmem [resolvable:$true] %s253
      %s255 = sshll.u32 %s4, 4
      %s256 = int_to_ptr.hbm [resolvable:$true] %s255
      %258 = dma.vmem_to_hbm [thread:$0]  %s254, 32, %s256, [#allocation4]
    $region29: #{tpu_custom_call.1} parent=1 // pred_fallthru
      _
    // Predicated region
    $region30: #{tpu_custom_call.1} parent=1 // pred_check
      _
    $region31: #{tpu_custom_call.1} parent=1 // pred_check_branch
      %260 = sbr.rel (0) target = $region33
    $region32: #{tpu_custom_call.1} parent=1 // pred_region
      %262 = vsyncadd [#allocation9], 0
      %s264 = sshll.u32 [#allocation8], 4
      %s265 = int_to_ptr.vmem [resolvable:$true] %s264
      %s266 = sshll.u32 %s5, 4
      %s267 = int_to_ptr.hbm [resolvable:$true] %s266
      %269 = dma.vmem_to_hbm [thread:$0]  %s265, 32, %s267, [#allocation9]
    $region33: #{tpu_custom_call.1} parent=1 // pred_fallthru
      _
    // Predicated region
    $region34: #{tpu_custom_call.1} parent=1 // pred_check
      _
    $region35: #{tpu_custom_call.1} parent=1 // pred_check_branch
      %271 = sbr.rel (0) target = $region37
    $region36: #{tpu_custom_call.1} parent=1 // pred_region
      %273 = dma.done [#allocation4], 32
    $region37: #{tpu_custom_call.1} parent=1 // pred_fallthru
      _
    // Predicated region
    $region38: #{tpu_custom_call.1} parent=1 // pred_check
      _
    $region39: #{tpu_custom_call.1} parent=1 // pred_check_branch
      %275 = sbr.rel (0) target = $region41
    $region40: #{tpu_custom_call.1} parent=1 // pred_region
      %277 = dma.done [#allocation9], 32
    $region41: #{tpu_custom_call.1} parent=1 // pred_fallthru
      _
    %278 = vsyncpa [#allocation3], 1
    %279 = vsyncpa [#allocation6], 1
    %280 = vsyncpa [#allocation4], 1
    %281 = vsyncpa [#allocation9], 1

</llo_original>
